<compile_context>
chip_gen: v7x
topology: tpu7x:2x2x1
jax: 0.10.0
libtpu: 0.0.40
codegen_flags: <defaults>
</compile_context>

<pallas_src>
import math
import functools

import jax
import jax.numpy as jnp
from jax.experimental import pallas as pl
from jax.experimental.pallas import tpu as pltpu

MIN_WEIGHT = 0.05


def _round_up(x, m):
    return ((x + m - 1) // m) * m


def _actor_kernel(x_ref, w1_ref, b1_ref, w2_ref, b2_ref, w3_ref, b3_ref, out_ref,
                  *, action_dim, min_weight):
    # --- fc1 + ReLU (MXU matmul, f32 accumulate) ---
    x = x_ref[...]
    h1 = jnp.dot(x, w1_ref[...], preferred_element_type=jnp.float32) + b1_ref[...]
    h1 = jnp.maximum(h1, 0.0)

    # --- fc2 + ReLU (cast activation back to weight dtype for the MXU) ---
    h2 = jnp.dot(h1.astype(w2_ref.dtype), w2_ref[...],
                 preferred_element_type=jnp.float32) + b2_ref[...]
    h2 = jnp.maximum(h2, 0.0)

    # --- fc3 logits (lane-padded to 128 columns; padded cols have zero W/b) ---
    logits = jnp.dot(h2.astype(w3_ref.dtype), w3_ref[...],
                     preferred_element_type=jnp.float32) + b3_ref[...]

    # Mask the zero-padded action lanes so they take no part in the softmax,
    # the min-weight clamp, or the renormalization.
    lane = jax.lax.broadcasted_iota(jnp.int32, logits.shape, 1)
    valid = lane < action_dim
    logits = jnp.where(valid, logits, jnp.float32(-1e30))

    # --- numerically stable softmax; EUP approx reciprocal for the denominator
    #     (uniform per-row scale error is removed by the exact renorm below) ---
    m = jnp.max(logits, axis=-1, keepdims=True)
    e = jnp.exp(logits - m)                       # padded lanes -> exp(-huge) == 0
    w = e * pl.reciprocal(jnp.sum(e, axis=-1, keepdims=True), approx=True)

    # --- clamp valid lanes to min weight, zero padded lanes, then renormalize
    #     with an EXACT divide so output rows sum to 1 to f32 rounding ---
    w = jnp.where(valid, jnp.maximum(w, min_weight), 0.0)
    w = w / jnp.sum(w, axis=-1, keepdims=True)

    out_ref[...] = w.astype(out_ref.dtype)


@functools.partial(jax.jit, static_argnames=("batch_tile", "compute_dtype"))
def actor_forward(state, params, *, batch_tile=4096, compute_dtype=jnp.bfloat16):
    """state: (B, state_dim) f32; params: dict of w1,b1,w2,b2,w3,b3."""
    w1, b1, w2, b2, w3, b3 = (params[k] for k in ("w1", "b1", "w2", "b2", "w3", "b3"))
    B, state_dim = state.shape
    hidden_dim = w1.shape[1]
    action_dim = w3.shape[1]

    # Lane-dense padding of the hidden / action feature axes (zeros are exact
    # through matmul + ReLU; padded action lanes are masked in-kernel).
    hpad = _round_up(hidden_dim, 128)
    apad = _round_up(action_dim, 128)

    w1p = jnp.pad(w1, ((0, 0), (0, hpad - hidden_dim))).astype(compute_dtype)
    b1p = jnp.pad(b1, ((0, 0), (0, hpad - hidden_dim))).astype(jnp.float32)
    w2p = jnp.pad(w2, ((0, hpad - hidden_dim), (0, hpad - hidden_dim))).astype(compute_dtype)
    b2p = jnp.pad(b2, ((0, 0), (0, hpad - hidden_dim))).astype(jnp.float32)
    w3p = jnp.pad(w3, ((0, hpad - hidden_dim), (0, apad - action_dim))).astype(compute_dtype)
    b3p = jnp.pad(b3, ((0, 0), (0, apad - action_dim))).astype(jnp.float32)

    # bf16 operands for the MXU (biases + accumulation stay f32).
    x = state.astype(compute_dtype)

    # Batch tile: multiple of 8 sublanes, big enough to amortize per-step
    # pipeline overhead, but capped so the grid keeps >= 2 steps (v7x megacore).
    tb = min(batch_tile, _round_up(pl.cdiv(B, 2), 8))
    tb = max(tb, 8)
    grid = (pl.cdiv(B, tb),)   # ragged last tile handled by Pallas OOB masking

    # Weights / biases: full-array blocks, constant index map -> VMEM-resident.
    const2d = lambda arr: pl.BlockSpec(arr.shape, lambda i: (0, 0))

    flops = 2 * B * (state_dim * hpad + hpad * hpad + hpad * apad)
    bytes_accessed = (
        B * state_dim * x.dtype.itemsize                         # streamed input
        + B * apad * 4                                           # streamed output (f32)
        + (state_dim * hpad + hpad * hpad + hpad * apad) * w1p.dtype.itemsize
        + (2 * hpad + apad) * 4                                  # f32 biases
    )
    cost = pl.CostEstimate(flops=flops,
                           transcendentals=B * apad,
                           bytes_accessed=bytes_accessed)

    out = pl.pallas_call(
        functools.partial(_actor_kernel, action_dim=action_dim, min_weight=MIN_WEIGHT),
        out_shape=jax.ShapeDtypeStruct((B, apad), jnp.float32),
        grid=grid,
        in_specs=[
            pl.BlockSpec((tb, state_dim), lambda i: (i, 0)),     # streamed per tile
            const2d(w1p), const2d(b1p),
            const2d(w2p), const2d(b2p),
            const2d(w3p), const2d(b3p),
        ],
        out_specs=pl.BlockSpec((tb, apad), lambda i: (i, 0)),
        compiler_params=pltpu.CompilerParams(
            dimension_semantics=("parallel",),        # megacore shard on v7x
            vmem_limit_bytes=32 * 1024 * 1024,        # safe on v5e/v6e/v7x, >> actual use
        ),
        cost_estimate=cost,
    )(x, w1p, b1p, w2p, b2p, w3p, b3p)

    return out[:, :action_dim]


def _xavier_uniform(key, fan_in, fan_out):
    # matches nn.init.xavier_uniform_ (gain=1): U(-a, a), a = sqrt(6/(fan_in+fan_out))
    a = math.sqrt(6.0 / (fan_in + fan_out))
    return jax.random.uniform(key, (fan_in, fan_out), jnp.float32, -a, a)


def init_actor_params(key, state_dim, action_dim, hidden_dim=64):
    k1, k2, k3, kb1, kb2 = jax.random.split(key, 5)
    # fc1/fc2 biases: PyTorch Linear default init U(-1/sqrt(fan_in), 1/sqrt(fan_in))
    b1_bound = 1.0 / math.sqrt(state_dim)
    b2_bound = 1.0 / math.sqrt(hidden_dim)
    return {
        "w1": _xavier_uniform(k1, state_dim, hidden_dim),
        "b1": jax.random.uniform(kb1, (1, hidden_dim), jnp.float32, -b1_bound, b1_bound),
        "w2": _xavier_uniform(k2, hidden_dim, hidden_dim),
        "b2": jax.random.uniform(kb2, (1, hidden_dim), jnp.float32, -b2_bound, b2_bound),
        "w3": _xavier_uniform(k3, hidden_dim, action_dim),
        "b3": jnp.zeros((1, action_dim), jnp.float32),  # nn.init.zeros_(fc3.bias)
    }


def _reference(state, p):
    h1 = jnp.maximum(state @ p["w1"] + p["b1"], 0.0)
    h2 = jnp.maximum(h1 @ p["w2"] + p["b2"], 0.0)
    logits = h2 @ p["w3"] + p["b3"]
    w = jax.nn.softmax(logits, axis=-1)
    w = jnp.maximum(w, MIN_WEIGHT)
    return w / jnp.sum(w, axis=-1, keepdims=True)


if __name__ == "__main__":
    key = jax.random.PRNGKey(0)
    k_params, k_state = jax.random.split(key)

    batch, state_dim, action_dim, hidden_dim = 8, 16, 8, 64
    params = init_actor_params(k_params, state_dim, action_dim, hidden_dim)
    state = jax.random.normal(k_state, (batch, state_dim), jnp.float32)

    ref = _reference(state, params)

    # f32 compute path: structural check (exact final renorm -> tight simplex).
    out_f32 = jax.block_until_ready(
        actor_forward(state, params, compute_dtype=jnp.float32))
    assert out_f32.shape == (batch, action_dim)
    assert bool(jnp.all(jnp.abs(jnp.sum(out_f32, axis=-1) - 1.0) < 1e-4))
    assert bool(jnp.allclose(out_f32, ref, atol=5e-3, rtol=5e-3))

    # bf16 operand path (default / fast on v6e+v7x): looser value tolerance,
    # rows still sum to 1 tightly because the final renorm is an exact f32 divide.
    out = jax.block_until_ready(actor_forward(state, params))
    assert out.shape == (batch, action_dim)
    assert bool(jnp.all(jnp.abs(jnp.sum(out, axis=-1) - 1.0) < 1e-4))
    assert bool(jnp.allclose(out, ref, atol=2e-2, rtol=2e-2))

    # Larger, non-tile-aligned batch exercises the ragged last tile (no input pad copy).
    big_state = jax.random.normal(jax.random.PRNGKey(1), (1000, state_dim), jnp.float32)
    big_out = jax.block_until_ready(actor_forward(big_state, params))
    big_ref = _reference(big_state, params)
    assert big_out.shape == (1000, action_dim)
    assert bool(jnp.all(jnp.abs(jnp.sum(big_out, axis=-1) - 1.0) < 1e-4))
    assert bool(jnp.allclose(big_out, big_ref, atol=2e-2, rtol=2e-2))

    print("KERNEL_OK")
</pallas_src>

<mosaic_0001>
module attributes {stable_mosaic.version = 11 : i64} {
  func.func @_actor_kernel(%arg0: i32, %arg1: memref<8x16xf32, #tpu.memory_space<vmem>>, %arg2: memref<16x128xf32, #tpu.memory_space<vmem>>, %arg3: memref<1x128xf32, #tpu.memory_space<vmem>>, %arg4: memref<128x128xf32, #tpu.memory_space<vmem>>, %arg5: memref<1x128xf32, #tpu.memory_space<vmem>>, %arg6: memref<128x128xf32, #tpu.memory_space<vmem>>, %arg7: memref<1x128xf32, #tpu.memory_space<vmem>>, %arg8: memref<8x128xf32, #tpu.memory_space<vmem>>) attributes {dimension_semantics = [#tpu.dimension_semantics<parallel>], iteration_bounds = array<i64: 1>, scalar_prefetch = 0 : i64, scratch_operands = 0 : i64, tpu.core_type = #tpu.core_type<tc>, window_params = [{transform_indices = @transform_0, window_bounds = array<i64: 8, 16>}, {pipeline_mode = #tpu.pipeline_mode<synchronous>, transform_indices = @transform_1, window_bounds = array<i64: 16, 128>}, {pipeline_mode = #tpu.pipeline_mode<synchronous>, transform_indices = @transform_2, window_bounds = array<i64: 1, 128>}, {pipeline_mode = #tpu.pipeline_mode<synchronous>, transform_indices = @transform_3, window_bounds = array<i64: 128, 128>}, {pipeline_mode = #tpu.pipeline_mode<synchronous>, transform_indices = @transform_4, window_bounds = array<i64: 1, 128>}, {pipeline_mode = #tpu.pipeline_mode<synchronous>, transform_indices = @transform_5, window_bounds = array<i64: 128, 128>}, {pipeline_mode = #tpu.pipeline_mode<synchronous>, transform_indices = @transform_6, window_bounds = array<i64: 1, 128>}, {transform_indices = @transform_7, window_bounds = array<i64: 8, 128>}]} {
    %c0 = arith.constant 0 : index
    %c0_0 = arith.constant 0 : index
    %0 = vector.load %arg1[%c0, %c0_0] : memref<8x16xf32, #tpu.memory_space<vmem>>, vector<8x16xf32>
    %c0_1 = arith.constant 0 : index
    %c0_2 = arith.constant 0 : index
    %1 = vector.load %arg2[%c0_1, %c0_2] : memref<16x128xf32, #tpu.memory_space<vmem>>, vector<16x128xf32>
    %cst = arith.constant dense<0.000000e+00> : vector<8x128xf32>
    %2 = tpu.matmul %0, %1, %cst {dimension_numbers = #tpu.dot_dimension_numbers<[1], [0], [0], [1], [0, 0, 1, 1], [], []>} : vector<8x16xf32>, vector<16x128xf32>, vector<8x128xf32> -> vector<8x128xf32>
    %c0_3 = arith.constant 0 : index
    %c0_4 = arith.constant 0 : index
    %3 = vector.load %arg3[%c0_3, %c0_4] : memref<1x128xf32, #tpu.memory_space<vmem>>, vector<1x128xf32>
    %4 = vector.broadcast %3 : vector<1x128xf32> to vector<8x128xf32>
    %5 = arith.addf %2, %4 : vector<8x128xf32>
    %cst_5 = arith.constant 0.000000e+00 : f32
    %6 = vector.broadcast %cst_5 : f32 to vector<8x128xf32>
    %7 = arith.maximumf %5, %6 : vector<8x128xf32>
    %c0_6 = arith.constant 0 : index
    %c0_7 = arith.constant 0 : index
    %8 = vector.load %arg4[%c0_6, %c0_7] : memref<128x128xf32, #tpu.memory_space<vmem>>, vector<128x128xf32>
    %cst_8 = arith.constant dense<0.000000e+00> : vector<8x128xf32>
    %9 = tpu.matmul %7, %8, %cst_8 {dimension_numbers = #tpu.dot_dimension_numbers<[1], [0], [0], [1], [0, 0, 1, 1], [], []>} : vector<8x128xf32>, vector<128x128xf32>, vector<8x128xf32> -> vector<8x128xf32>
    %c0_9 = arith.constant 0 : index
    %c0_10 = arith.constant 0 : index
    %10 = vector.load %arg5[%c0_9, %c0_10] : memref<1x128xf32, #tpu.memory_space<vmem>>, vector<1x128xf32>
    %11 = vector.broadcast %10 : vector<1x128xf32> to vector<8x128xf32>
    %12 = arith.addf %9, %11 : vector<8x128xf32>
    %cst_11 = arith.constant 0.000000e+00 : f32
    %13 = vector.broadcast %cst_11 : f32 to vector<8x128xf32>
    %14 = arith.maximumf %12, %13 : vector<8x128xf32>
    %c0_12 = arith.constant 0 : index
    %c0_13 = arith.constant 0 : index
    %15 = vector.load %arg6[%c0_12, %c0_13] : memref<128x128xf32, #tpu.memory_space<vmem>>, vector<128x128xf32>
    %cst_14 = arith.constant dense<0.000000e+00> : vector<8x128xf32>
    %16 = tpu.matmul %14, %15, %cst_14 {dimension_numbers = #tpu.dot_dimension_numbers<[1], [0], [0], [1], [0, 0, 1, 1], [], []>} : vector<8x128xf32>, vector<128x128xf32>, vector<8x128xf32> -> vector<8x128xf32>
    %c0_15 = arith.constant 0 : index
    %c0_16 = arith.constant 0 : index
    %17 = vector.load %arg7[%c0_15, %c0_16] : memref<1x128xf32, #tpu.memory_space<vmem>>, vector<1x128xf32>
    %18 = vector.broadcast %17 : vector<1x128xf32> to vector<8x128xf32>
    %19 = arith.addf %16, %18 : vector<8x128xf32>
    %20 = tpu.iota {dimensions = array<i32: 1>} : vector<8x128xi32>
    %c8_i32 = arith.constant 8 : i32
    %21 = vector.broadcast %c8_i32 : i32 to vector<8x128xi32>
    %22 = arith.cmpi slt, %20, %21 : vector<8x128xi32>
    %cst_17 = arith.constant -1.000000e+30 : f32
    %23 = vector.broadcast %cst_17 : f32 to vector<8x128xf32>
    %24 = arith.select %22, %19, %23 : vector<8x128xi1>, vector<8x128xf32>
    %cst_18 = arith.constant dense<0xFF800000> : vector<8xf32>
    %25 = vector.multi_reduction <maximumf>, %24, %cst_18 [1] : vector<8x128xf32> to vector<8xf32>
    %26 = vector.shape_cast %25 : vector<8xf32> to vector<8x1xf32>
    %27 = vector.broadcast %26 : vector<8x1xf32> to vector<8x128xf32>
    %28 = arith.subf %24, %27 : vector<8x128xf32>
    %29 = math.exp %28 : vector<8x128xf32>
    %cst_19 = arith.constant dense<0.000000e+00> : vector<8xf32>
    %30 = vector.multi_reduction <add>, %29, %cst_19 [1] : vector<8x128xf32> to vector<8xf32>
    %31 = vector.shape_cast %30 : vector<8xf32> to vector<8x1xf32>
    %32 = tpu.reciprocal %31 {approx = true} : vector<8x1xf32> -> vector<8x1xf32>
    %33 = vector.broadcast %32 : vector<8x1xf32> to vector<8x128xf32>
    %34 = arith.mulf %29, %33 : vector<8x128xf32>
    %cst_20 = arith.constant 5.000000e-02 : f32
    %35 = vector.broadcast %cst_20 : f32 to vector<8x128xf32>
    %36 = arith.maximumf %34, %35 : vector<8x128xf32>
    %cst_21 = arith.constant 0.000000e+00 : f32
    %37 = vector.broadcast %cst_21 : f32 to vector<8x128xf32>
    %38 = arith.select %22, %36, %37 : vector<8x128xi1>, vector<8x128xf32>
    %cst_22 = arith.constant dense<0.000000e+00> : vector<8xf32>
    %39 = vector.multi_reduction <add>, %38, %cst_22 [1] : vector<8x128xf32> to vector<8xf32>
    %40 = vector.shape_cast %39 : vector<8xf32> to vector<8x1xf32>
    %41 = vector.broadcast %40 : vector<8x1xf32> to vector<8x128xf32>
    %42 = arith.divf %38, %41 : vector<8x128xf32>
    %c0_23 = arith.constant 0 : index
    %c0_24 = arith.constant 0 : index
    %43 = vector.load %arg8[%c0_23, %c0_24] : memref<8x128xf32, #tpu.memory_space<vmem>>, vector<8x128xf32>
    tpu.vector_store %arg8[%c0_23, %c0_24], %42 {strides = array<i32>} : memref<8x128xf32, #tpu.memory_space<vmem>>, vector<8x128xf32>,
    return
  }
  func.func @transform_0(%arg0: i32) -> (i32, i32) {
    %c0_i32 = arith.constant 0 : i32
    %c0_i32_0 = arith.constant 0 : i32
    return %arg0, %c0_i32 : i32, i32
  }
  func.func @transform_1(%arg0: i32) -> (i32, i32) {
    %c0_i32 = arith.constant 0 : i32
    %c0_i32_0 = arith.constant 0 : i32
    %c0_i32_1 = arith.constant 0 : i32
    return %c0_i32, %c0_i32_0 : i32, i32
  }
  func.func @transform_2(%arg0: i32) -> (i32, i32) {
    %c0_i32 = arith.constant 0 : i32
    %c0_i32_0 = arith.constant 0 : i32
    %c0_i32_1 = arith.constant 0 : i32
    return %c0_i32, %c0_i32_0 : i32, i32
  }
  func.func @transform_3(%arg0: i32) -> (i32, i32) {
    %c0_i32 = arith.constant 0 : i32
    %c0_i32_0 = arith.constant 0 : i32
    %c0_i32_1 = arith.constant 0 : i32
    return %c0_i32, %c0_i32_0 : i32, i32
  }
  func.func @transform_4(%arg0: i32) -> (i32, i32) {
    %c0_i32 = arith.constant 0 : i32
    %c0_i32_0 = arith.constant 0 : i32
    %c0_i32_1 = arith.constant 0 : i32
    return %c0_i32, %c0_i32_0 : i32, i32
  }
  func.func @transform_5(%arg0: i32) -> (i32, i32) {
    %c0_i32 = arith.constant 0 : i32
    %c0_i32_0 = arith.constant 0 : i32
    %c0_i32_1 = arith.constant 0 : i32
    return %c0_i32, %c0_i32_0 : i32, i32
  }
  func.func @transform_6(%arg0: i32) -> (i32, i32) {
    %c0_i32 = arith.constant 0 : i32
    %c0_i32_0 = arith.constant 0 : i32
    %c0_i32_1 = arith.constant 0 : i32
    return %c0_i32, %c0_i32_0 : i32, i32
  }
  func.func @transform_7(%arg0: i32) -> (i32, i32) {
    %c0_i32 = arith.constant 0 : i32
    %c0_i32_0 = arith.constant 0 : i32
    return %arg0, %c0_i32 : i32, i32
  }
}

</mosaic_0001>

<llo_original>
// kernel: actor_forward.1
$region0: #{actor_forward.1}
  #allocation0 [shape = 'u32[]', space=smem, size = 0x4, offset = 0x4, fixed_abs, tag = 'smem constant byte address 0x4 - core index']
  #allocation1 [shape = 'u32[144,128]{1,0:T(1,128)}', space=vmem, size = 0x12000, scoped, tag = 'internal scratch']
  %s0 = inlined_call_operand.vmem [shape: f32[8,16], index: 0, kind: input, shape index: {}]
  %s1 = inlined_call_operand.vmem [shape: f32[16,128], index: 1, kind: input, shape index: {}]
  %s2 = inlined_call_operand.vmem [shape: f32[1,128], index: 2, kind: input, shape index: {}]
  %s3 = inlined_call_operand.vmem [shape: f32[128,128], index: 3, kind: input, shape index: {}]
  %s4 = inlined_call_operand.vmem [shape: f32[1,128], index: 4, kind: input, shape index: {}]
  %s5 = inlined_call_operand.vmem [shape: f32[128,128], index: 5, kind: input, shape index: {}]
  %s6 = inlined_call_operand.vmem [shape: f32[1,128], index: 6, kind: input, shape index: {}]
  %s7 = inlined_call_operand.hbm [shape: f32[8,128], index: 7, kind: output, shape index: {}]
  %s8 = sld [smem:[#allocation0]]
  $region38: #{actor_forward.1} parent=0
    _
  %s10 = ssub.s32 1, %s8
  %s11 = scalar_select 0, %s10, %s8
  $region1: #{actor_forward.1} parent=0
    #allocation2 [shape = 'u8[4096]{0}', space=vmem, size = 0x1000, scoped, tag = 'output window, operand 0, single buffered']
    #allocation3 [shape = 's32[1]{0}', space=sflag, size = 0x4, scoped, tag = 'scoped memory for actor_forward.1']
    %12 = vsyncpa [#allocation3], 0
    // Predicated region
    $region2: #{actor_forward.1} parent=1 // pred_check
      _
    $region3: #{actor_forward.1} parent=1 // pred_check_branch
      %14 = sbr.rel (0) target = $region5
    $region4: #{actor_forward.1} parent=1 // pred_region
      _
    $region5: #{actor_forward.1} parent=1 // pred_fallthru
      _
    // Predicated region
    $region6: #{actor_forward.1} parent=1 // pred_check
      _
    $region7: #{actor_forward.1} parent=1 // pred_check_branch
      %16 = sbr.rel (0) target = $region9
    $region8: #{actor_forward.1} parent=1 // pred_region
      _
    $region9: #{actor_forward.1} parent=1 // pred_fallthru
      _
    // Predicated region
    $region10: #{actor_forward.1} parent=1 // pred_check
      _
    $region11: #{actor_forward.1} parent=1 // pred_check_branch
      %18 = sbr.rel (0) target = $region13
    $region12: #{actor_forward.1} parent=1 // pred_region
      _
    $region13: #{actor_forward.1} parent=1 // pred_fallthru
      _
    // Predicated region
    $region14: #{actor_forward.1} parent=1 // pred_check
      _
    $region15: #{actor_forward.1} parent=1 // pred_check_branch
      %20 = sbr.rel (0) target = $region17
    $region16: #{actor_forward.1} parent=1 // pred_region
      _
    $region17: #{actor_forward.1} parent=1 // pred_fallthru
      _
    // Predicated region
    $region18: #{actor_forward.1} parent=1 // pred_check
      _
    $region19: #{actor_forward.1} parent=1 // pred_check_branch
      %22 = sbr.rel (0) target = $region21
    $region20: #{actor_forward.1} parent=1 // pred_region
      _
    $region21: #{actor_forward.1} parent=1 // pred_fallthru
      _
    // Predicated region
    $region22: #{actor_forward.1} parent=1 // pred_check
      _
    $region23: #{actor_forward.1} parent=1 // pred_check_branch
      %24 = sbr.rel (0) target = $region25
    $region24: #{actor_forward.1} parent=1 // pred_region
      _
    $region25: #{actor_forward.1} parent=1 // pred_fallthru
      _
    // Predicated region
    $region26: #{actor_forward.1} parent=1 // pred_check
      _
    $region27: #{actor_forward.1} parent=1 // pred_check_branch
      %26 = sbr.rel (0) target = $region29
    $region28: #{actor_forward.1} parent=1 // pred_region
      _
    $region29: #{actor_forward.1} parent=1 // pred_fallthru
      _
    %v27 = vld [vmem:[%s0] sm:$0xff]
    %v28 = vld [vmem:[%s1] sm:$0xff]
    %v29 = vld [vmem:[%s1 + $0x8] sm:$0xff]
    %v30 = vld [vmem:[%s2] sm:$0x1]
    %v32 = vlaneseq
    %v33 = vshrl.u32 %v32, 7
    %v34 = vsub.s32 0, %v33
    %v35 = vrot.slane %v30, %v34
    %vm37 = vcmask 130048
    %v39 = vsel %vm37, %v27, 0
    %41 = vmatprep.subr.mxu0 0.0
    %42 = vmatpush1.msra.mxu0 %v28
    %43 = vmatprep.subr.mxu0 0.0
    %44 = vmatpush1.msra.mxu0 %v29
    %45 = vmatprep.subr.mxu0 0.0
    %46 = vmatpush1.msra.mxu0 0.0
    %47 = vmatprep.subr.mxu0 0.0
    %48 = vmatpush1.msra.mxu0 0.0
    %49 = vmatprep.subr.mxu0 0.0
    %50 = vmatpush1.msra.mxu0 0.0
    %51 = vmatprep.subr.mxu0 0.0
    %52 = vmatpush1.msra.mxu0 0.0
    %53 = vmatprep.subr.mxu0 0.0
    %54 = vmatpush1.msra.mxu0 0.0
    %55 = vmatprep.subr.mxu0 0.0
    %56 = vmatpush1.msra.mxu0 0.0
    %57 = vmatprep.subr.mxu0 0.0
    %58 = vmatpush1.msra.mxu0 0.0
    %59 = vmatprep.subr.mxu0 0.0
    %60 = vmatpush1.msra.mxu0 0.0
    %61 = vmatprep.subr.mxu0 0.0
    %62 = vmatpush1.msra.mxu0 0.0
    %63 = vmatprep.subr.mxu0 0.0
    %64 = vmatpush1.msra.mxu0 0.0
    %65 = vmatprep.subr.mxu0 0.0
    %66 = vmatpush1.msra.mxu0 0.0
    %67 = vmatprep.subr.mxu0 0.0
    %68 = vmatpush1.msra.mxu0 0.0
    %69 = vmatprep.subr.mxu0 0.0
    %70 = vmatpush1.msra.mxu0 0.0
    %71 = vmatprep.subr.mxu0 0.0
    %72 = vmatpush1.msra.mxu0 0.0
    %73 = vmatprep.subr.mxu0 0.0
    %74 = vmatpush1.msra.mxu0 0.0
    %75 = vmatprep.subr.mxu0 0.0
    %76 = vmatpush1.msra.mxu0 0.0
    %77 = vmatprep.subr.mxu0 0.0
    %78 = vmatpush1.msra.mxu0 0.0
    %79 = vmatprep.subr.mxu0 0.0
    %80 = vmatpush1.msra.mxu0 0.0
    %81 = vmatprep.subr.mxu0 0.0
    %82 = vmatpush1.msra.mxu0 0.0
    %83 = vmatprep.subr.mxu0 0.0
    %84 = vmatpush1.msra.mxu0 0.0
    %85 = vmatprep.subr.mxu0 0.0
    %86 = vmatpush1.msra.mxu0 0.0
    %87 = vmatprep.subr.mxu0 0.0
    %88 = vmatpush1.msra.mxu0 0.0
    %89 = vmatprep.subr.mxu0 0.0
    %90 = vmatpush1.msra.mxu0 0.0
    %91 = vmatprep.subr.mxu0 0.0
    %92 = vmatpush1.msra.mxu0 0.0
    %93 = vmatprep.subr.mxu0 0.0
    %94 = vmatpush1.msra.mxu0 0.0
    %95 = vmatprep.subr.mxu0 0.0
    %96 = vmatpush1.msra.mxu0 0.0
    %97 = vmatprep.subr.mxu0 0.0
    %98 = vmatpush1.msra.mxu0 0.0
    %99 = vmatprep.subr.mxu0 0.0
    %100 = vmatpush1.msra.mxu0 0.0
    %101 = vmatprep.subr.mxu0 0.0
    %102 = vmatpush1.msra.mxu0 0.0
    %103 = vmatprep.subr.mxu0 0.0
    %104 = vmatpush1.msra.mxu0 0.0
    %105 = vmatprep.mubr.f32.mxu0 0.0
    %106 = vmatmul.mubr.f32.gmra.mrb[0].mxu0 %v39
    %v107 = vpop.f32.mrb[0].mxu0
    %v108 = vadd.f32 %v35, %v107
    %v109 = vpop.f32.mrb[0].mxu0
    %110 = vdwg.mxu0
    %v111 = vmax.f32 %v108, 0.0
    %v112 = vld [vmem:[%s3] sm:$0xff]
    %v113 = vld [vmem:[%s3 + $0x8] sm:$0xff]
    %v114 = vld [vmem:[%s3 + $0x10] sm:$0xff]
    %v115 = vld [vmem:[%s3 + $0x18] sm:$0xff]
    %v116 = vld [vmem:[%s3 + $0x20] sm:$0xff]
    %v117 = vld [vmem:[%s3 + $0x28] sm:$0xff]
    %v118 = vld [vmem:[%s3 + $0x30] sm:$0xff]
    %v119 = vld [vmem:[%s3 + $0x38] sm:$0xff]
    %v120 = vld [vmem:[%s3 + $0x40] sm:$0xff]
    %v121 = vld [vmem:[%s3 + $0x48] sm:$0xff]
    %v122 = vld [vmem:[%s3 + $0x50] sm:$0xff]
    %v123 = vld [vmem:[%s3 + $0x58] sm:$0xff]
    %v124 = vld [vmem:[%s3 + $0x60] sm:$0xff]
    %v125 = vld [vmem:[%s3 + $0x68] sm:$0xff]
    %v126 = vld [vmem:[%s3 + $0x70] sm:$0xff]
    %v127 = vld [vmem:[%s3 + $0x78] sm:$0xff]
    %v128 = vld [vmem:[%s4] sm:$0x1]
    %v130 = vlaneseq
    %v131 = vshrl.u32 %v130, 7
    %v132 = vsub.s32 0, %v131
    %v133 = vrot.slane %v128, %v132
    %135 = vmatprep.subr.mxu0 0.0
    %136 = vmatpush1.msra.mxu0 %v112
    %137 = vmatprep.subr.mxu0 0.0
    %138 = vmatpush1.msra.mxu0 %v113
    %139 = vmatprep.subr.mxu0 0.0
    %140 = vmatpush1.msra.mxu0 %v114
    %141 = vmatprep.subr.mxu0 0.0
    %142 = vmatpush1.msra.mxu0 %v115
    %143 = vmatprep.subr.mxu0 0.0
    %144 = vmatpush1.msra.mxu0 %v116
    %145 = vmatprep.subr.mxu0 0.0
    %146 = vmatpush1.msra.mxu0 %v117
    %147 = vmatprep.subr.mxu0 0.0
    %148 = vmatpush1.msra.mxu0 %v118
    %149 = vmatprep.subr.mxu0 0.0
    %150 = vmatpush1.msra.mxu0 %v119
    %151 = vmatprep.subr.mxu0 0.0
    %152 = vmatpush1.msra.mxu0 %v120
    %153 = vmatprep.subr.mxu0 0.0
    %154 = vmatpush1.msra.mxu0 %v121
    %155 = vmatprep.subr.mxu0 0.0
    %156 = vmatpush1.msra.mxu0 %v122
    %157 = vmatprep.subr.mxu0 0.0
    %158 = vmatpush1.msra.mxu0 %v123
    %159 = vmatprep.subr.mxu0 0.0
    %160 = vmatpush1.msra.mxu0 %v124
    %161 = vmatprep.subr.mxu0 0.0
    %162 = vmatpush1.msra.mxu0 %v125
    %163 = vmatprep.subr.mxu0 0.0
    %164 = vmatpush1.msra.mxu0 %v126
    %165 = vmatprep.subr.mxu0 0.0
    %166 = vmatpush1.msra.mxu0 %v127
    %167 = vmatprep.subr.mxu0 0.0
    %168 = vmatpush1.msra.mxu0 0.0
    %169 = vmatprep.subr.mxu0 0.0
    %170 = vmatpush1.msra.mxu0 0.0
    %171 = vmatprep.subr.mxu0 0.0
    %172 = vmatpush1.msra.mxu0 0.0
    %173 = vmatprep.subr.mxu0 0.0
    %174 = vmatpush1.msra.mxu0 0.0
    %175 = vmatprep.subr.mxu0 0.0
    %176 = vmatpush1.msra.mxu0 0.0
    %177 = vmatprep.subr.mxu0 0.0
    %178 = vmatpush1.msra.mxu0 0.0
    %179 = vmatprep.subr.mxu0 0.0
    %180 = vmatpush1.msra.mxu0 0.0
    %181 = vmatprep.subr.mxu0 0.0
    %182 = vmatpush1.msra.mxu0 0.0
    %183 = vmatprep.subr.mxu0 0.0
    %184 = vmatpush1.msra.mxu0 0.0
    %185 = vmatprep.subr.mxu0 0.0
    %186 = vmatpush1.msra.mxu0 0.0
    %187 = vmatprep.subr.mxu0 0.0
    %188 = vmatpush1.msra.mxu0 0.0
    %189 = vmatprep.subr.mxu0 0.0
    %190 = vmatpush1.msra.mxu0 0.0
    %191 = vmatprep.subr.mxu0 0.0
    %192 = vmatpush1.msra.mxu0 0.0
    %193 = vmatprep.subr.mxu0 0.0
    %194 = vmatpush1.msra.mxu0 0.0
    %195 = vmatprep.subr.mxu0 0.0
    %196 = vmatpush1.msra.mxu0 0.0
    %197 = vmatprep.subr.mxu0 0.0
    %198 = vmatpush1.msra.mxu0 0.0
    %199 = vmatprep.mubr.f32.mxu0 0.0
    %200 = vmatmul.mubr.f32.gmra.mrb[0].mxu0 %v111
    %v201 = vpop.f32.mrb[0].mxu0
    %v202 = vadd.f32 %v133, %v201
    %v203 = vpop.f32.mrb[0].mxu0
    %204 = vdwg.mxu0
    %v205 = vmax.f32 %v202, 0.0
    %v206 = vld [vmem:[%s5] sm:$0xff]
    %v207 = vld [vmem:[%s5 + $0x8] sm:$0xff]
    %v208 = vld [vmem:[%s5 + $0x10] sm:$0xff]
    %v209 = vld [vmem:[%s5 + $0x18] sm:$0xff]
    %v210 = vld [vmem:[%s5 + $0x20] sm:$0xff]
    %v211 = vld [vmem:[%s5 + $0x28] sm:$0xff]
    %v212 = vld [vmem:[%s5 + $0x30] sm:$0xff]
    %v213 = vld [vmem:[%s5 + $0x38] sm:$0xff]
    %v214 = vld [vmem:[%s5 + $0x40] sm:$0xff]
    %v215 = vld [vmem:[%s5 + $0x48] sm:$0xff]
    %v216 = vld [vmem:[%s5 + $0x50] sm:$0xff]
    %v217 = vld [vmem:[%s5 + $0x58] sm:$0xff]
    %v218 = vld [vmem:[%s5 + $0x60] sm:$0xff]
    %v219 = vld [vmem:[%s5 + $0x68] sm:$0xff]
    %v220 = vld [vmem:[%s5 + $0x70] sm:$0xff]
    %v221 = vld [vmem:[%s5 + $0x78] sm:$0xff]
    %v222 = vld [vmem:[%s6] sm:$0x1]
    %v224 = vlaneseq
    %v225 = vshrl.u32 %v224, 7
    %v226 = vsub.s32 0, %v225
    %v227 = vrot.slane %v222, %v226
    %229 = vmatprep.subr.mxu0 0.0
    %230 = vmatpush1.msra.mxu0 %v206
    %231 = vmatprep.subr.mxu0 0.0
    %232 = vmatpush1.msra.mxu0 %v207
    %233 = vmatprep.subr.mxu0 0.0
    %234 = vmatpush1.msra.mxu0 %v208
    %235 = vmatprep.subr.mxu0 0.0
    %236 = vmatpush1.msra.mxu0 %v209
    %237 = vmatprep.subr.mxu0 0.0
    %238 = vmatpush1.msra.mxu0 %v210
    %239 = vmatprep.subr.mxu0 0.0
    %240 = vmatpush1.msra.mxu0 %v211
    %241 = vmatprep.subr.mxu0 0.0
    %242 = vmatpush1.msra.mxu0 %v212
    %243 = vmatprep.subr.mxu0 0.0
    %244 = vmatpush1.msra.mxu0 %v213
    %245 = vmatprep.subr.mxu0 0.0
    %246 = vmatpush1.msra.mxu0 %v214
    %247 = vmatprep.subr.mxu0 0.0
    %248 = vmatpush1.msra.mxu0 %v215
    %249 = vmatprep.subr.mxu0 0.0
    %250 = vmatpush1.msra.mxu0 %v216
    %251 = vmatprep.subr.mxu0 0.0
    %252 = vmatpush1.msra.mxu0 %v217
    %253 = vmatprep.subr.mxu0 0.0
    %254 = vmatpush1.msra.mxu0 %v218
    %255 = vmatprep.subr.mxu0 0.0
    %256 = vmatpush1.msra.mxu0 %v219
    %257 = vmatprep.subr.mxu0 0.0
    %258 = vmatpush1.msra.mxu0 %v220
    %259 = vmatprep.subr.mxu0 0.0
    %260 = vmatpush1.msra.mxu0 %v221
    %261 = vmatprep.subr.mxu0 0.0
    %262 = vmatpush1.msra.mxu0 0.0
    %263 = vmatprep.subr.mxu0 0.0
    %264 = vmatpush1.msra.mxu0 0.0
    %265 = vmatprep.subr.mxu0 0.0
    %266 = vmatpush1.msra.mxu0 0.0
    %267 = vmatprep.subr.mxu0 0.0
    %268 = vmatpush1.msra.mxu0 0.0
    %269 = vmatprep.subr.mxu0 0.0
    %270 = vmatpush1.msra.mxu0 0.0
    %271 = vmatprep.subr.mxu0 0.0
    %272 = vmatpush1.msra.mxu0 0.0
    %273 = vmatprep.subr.mxu0 0.0
    %274 = vmatpush1.msra.mxu0 0.0
    %275 = vmatprep.subr.mxu0 0.0
    %276 = vmatpush1.msra.mxu0 0.0
    %277 = vmatprep.subr.mxu0 0.0
    %278 = vmatpush1.msra.mxu0 0.0
    %279 = vmatprep.subr.mxu0 0.0
    %280 = vmatpush1.msra.mxu0 0.0
    %281 = vmatprep.subr.mxu0 0.0
    %282 = vmatpush1.msra.mxu0 0.0
    %283 = vmatprep.subr.mxu0 0.0
    %284 = vmatpush1.msra.mxu0 0.0
    %285 = vmatprep.subr.mxu0 0.0
    %286 = vmatpush1.msra.mxu0 0.0
    %287 = vmatprep.subr.mxu0 0.0
    %288 = vmatpush1.msra.mxu0 0.0
    %289 = vmatprep.subr.mxu0 0.0
    %290 = vmatpush1.msra.mxu0 0.0
    %291 = vmatprep.subr.mxu0 0.0
    %292 = vmatpush1.msra.mxu0 0.0
    %293 = vmatprep.mubr.f32.mxu0 0.0
    %294 = vmatmul.mubr.f32.gmra.mrb[0].mxu0 %v205
    %v295 = vpop.f32.mrb[0].mxu0
    %v296 = vadd.f32 %v227, %v295
    %v297 = vpop.f32.mrb[0].mxu0
    %298 = vdwg.mxu0
    %v299 = vlaneseq
    %v300 = vand.u32 %v299, 127
    %vm301 = vcmp.lt.s32.totalorder %v300, 8
    %v302 = vsel %vm301, %v296, -1e+30
    %303 = vmax.xlane.f32.xlu0 %v302
    %v304 = vpop.xlane.xlu0 %303
    %v305 = vsub.f32 %v302, %v304
    %v306 = vmul.f32 %v305, 1.442695
    %v307 = vpow.pop %v306
    %308 = vadd.xlane.f32.xlu0 %v307
    %v309 = vpop.xlane.xlu0 %308
    %v310 = vrcp.pop %v309
    %v311 = vmul.f32 %v307, %v310
    %v312 = vmax.f32 %v311, 0.05
    %v313 = vsel %vm301, %v312, 0.0
    %314 = vadd.xlane.f32.xlu0 %v313
    %v315 = vpop.xlane.xlu0 %314
    %v316 = vrcp.pop %v315
    %v317 = vmul.f32 %v313, %v316
    %318 = vst [vmem:[#allocation2] sm:$0xff] %v317
    // Predicated region
    $region30: #{actor_forward.1} parent=1 // pred_check
      _
    $region31: #{actor_forward.1} parent=1 // pred_check_branch
      %320 = sbr.rel (0) target = $region33
    $region32: #{actor_forward.1} parent=1 // pred_region
      %s322 = ssub.s32 128, 128
      %323 = vsyncadd [#allocation3], %s322
      %s325 = sshll.u32 [#allocation2], 4
      %s326 = int_to_ptr.vmem [resolvable:$true] %s325
      %328 = dma.vmem_to_hbm [thread:$0]  %s326, 128, %s7, [#allocation3]
    $region33: #{actor_forward.1} parent=1 // pred_fallthru
      _
    // Predicated region
    $region34: #{actor_forward.1} parent=1 // pred_check
      _
    $region35: #{actor_forward.1} parent=1 // pred_check_branch
      %330 = sbr.rel (0) target = $region37
    $region36: #{actor_forward.1} parent=1 // pred_region
      %331 = dma.done [#allocation3], 128
    $region37: #{actor_forward.1} parent=1 // pred_fallthru
      _
    %332 = vsyncpa [#allocation3], 1

</llo_original>
